<compile_context>
chip_gen: v5e
topology: v5e:2x2
jax: 0.10.0
libtpu: 0.0.40
codegen_flags: <defaults>
</compile_context>

<pallas_src>
import functools
import math

import jax
import jax.numpy as jnp
from jax import lax
from jax.experimental import pallas as pl
from jax.experimental.pallas import tpu as pltpu

LANES = 128            # vreg lane width
MAX_BLOCK_ROWS = 2048  # 128-lane rows per grid step (1 MiB per f32 input block)


def _sublane_quantum(*dtypes):
    """Minimal sublane multiple for the narrowest dtype (8/16/32 for 32/16/8-bit)."""
    q = 8
    for dt in dtypes:
        item = jnp.dtype(dt).itemsize
        q = max(q, 8 * max(1, 4 // max(1, item)))
    return q


def _huber_flat_kernel(*refs, delta, tm, rows, weighted):
    """Per-block Huber partial sums over a flattened (rows, 128) slab.

    Each grid step reduces a (tm, 128) block to an (8, 128) partial written to
    its own output slot (no carried accumulator -> grid axis is parallel).
    """
    if weighted:
        x_ref, t_ref, w_ref, o_ref = refs
    else:
        x_ref, t_ref, o_ref = refs
        w_ref = None

    i = pl.program_id(0)
    x = x_ref[...].astype(jnp.float32)
    t = t_ref[...].astype(jnp.float32)
    d = jnp.abs(x - t)
    loss = jnp.where(d < delta, 0.5 * d * d, delta * d - 0.5 * delta * delta)
    if weighted:
        loss = loss * w_ref[...].astype(jnp.float32)
    if rows % tm != 0:
        # Ragged last block: out-of-bounds rows hold unspecified data -> mask.
        valid = rows - i * tm
        ridx = lax.broadcasted_iota(jnp.int32, (tm, LANES), 0)
        loss = jnp.where(ridx < valid, loss, 0.0)
    # Sublane-group reduction: pure VPU vreg adds, result stays (8, 128).
    o_ref[0] = loss.reshape(tm // 8, 8, LANES).sum(axis=0)


def _huber_fused_weight_kernel(x_ref, t_ref, w_ref, o_ref, *, delta, tr, srows):
    """Weighted Huber partials without materializing the broadcast weight.

    x/t blocks are (1, 1, tr, 128) slices of (B, C, SR, 128); the weight block
    is a (1, tr, 128) slice of (B, SR, 128) whose index_map ignores the
    innermost channel grid axis, so Pallas reuses it across the channel loop.
    """
    s = pl.program_id(1)
    x = x_ref[0, 0].astype(jnp.float32)
    t = t_ref[0, 0].astype(jnp.float32)
    w = w_ref[0].astype(jnp.float32)
    d = jnp.abs(x - t)
    loss = jnp.where(d < delta, 0.5 * d * d, delta * d - 0.5 * delta * delta) * w
    if srows % tr != 0:
        valid = srows - s * tr
        ridx = lax.broadcasted_iota(jnp.int32, (tr, LANES), 0)
        loss = jnp.where(ridx < valid, loss, 0.0)
    o_ref[0] = loss.reshape(tr // 8, 8, LANES).sum(axis=0)


def _flat_rows(a):
    a = a.reshape(-1)
    pad = (-a.shape[0]) % LANES
    if pad:  # only for element counts not divisible by 128 (rare)
        a = jnp.pad(a, (0, pad))
    return a.reshape(-1, LANES)


def _huber_sum_flat(x, t, w, delta):
    """Sum of (optionally weighted) Huber loss over all elements."""
    weighted = w is not None
    arrays = [_flat_rows(x), _flat_rows(t)] + ([_flat_rows(w)] if weighted else [])
    rows = arrays[0].shape[0]
    q = _sublane_quantum(*(a.dtype for a in arrays))
    if rows < q:
        # Tiny input: pad up to one minimal tile (zeros contribute 0 loss).
        arrays = [jnp.pad(a, ((0, q - rows), (0, 0))) for a in arrays]
        rows = q
    tm = min(MAX_BLOCK_ROWS, (rows // q) * q)
    nblocks = pl.cdiv(rows, tm)
    kernel = functools.partial(
        _huber_flat_kernel, delta=delta, tm=tm, rows=rows, weighted=weighted)
    in_block = pl.BlockSpec((tm, LANES), lambda i: (i, 0))
    partials = pl.pallas_call(
        kernel,
        out_shape=jax.ShapeDtypeStruct((nblocks, 8, LANES), jnp.float32),
        grid_spec=pltpu.PrefetchScalarGridSpec(
            num_scalar_prefetch=0,
            grid=(nblocks,),
            in_specs=[in_block] * len(arrays),
            out_specs=pl.BlockSpec((1, 8, LANES), lambda i: (i, 0, 0)),
        ),
        compiler_params=pltpu.CompilerParams(
            dimension_semantics=("parallel",)),
    )(*arrays)
    return jnp.sum(partials)


def _huber_sum_fused(x, t, w, delta, B, C, SR):
    """Weighted sum with weight broadcast over the channel dim, fused in-kernel."""
    x4 = x.reshape(B, C, SR, LANES)
    t4 = t.reshape(B, C, SR, LANES)
    w3 = w.reshape(B, SR, LANES)
    q = _sublane_quantum(x4.dtype, t4.dtype, w3.dtype)
    tr = min(MAX_BLOCK_ROWS, (SR // q) * q)
    gs = pl.cdiv(SR, tr)
    kernel = functools.partial(
        _huber_fused_weight_kernel, delta=delta, tr=tr, srows=SR)
    partials = pl.pallas_call(
        kernel,
        out_shape=jax.ShapeDtypeStruct((B * gs * C, 8, LANES), jnp.float32),
        grid_spec=pltpu.PrefetchScalarGridSpec(
            num_scalar_prefetch=0,
            grid=(B, gs, C),  # channel innermost -> weight block reused in VMEM
            in_specs=[
                pl.BlockSpec((1, 1, tr, LANES), lambda b, s, c: (b, c, s, 0)),
                pl.BlockSpec((1, 1, tr, LANES), lambda b, s, c: (b, c, s, 0)),
                pl.BlockSpec((1, tr, LANES), lambda b, s, c: (b, s, 0)),
            ],
            out_specs=pl.BlockSpec(
                (1, 8, LANES),
                lambda b, s, c: (b * gs * C + s * C + c, 0, 0)),
        ),
        compiler_params=pltpu.CompilerParams(
            dimension_semantics=("parallel", "parallel", "parallel")),
    )(x4, t4, w3)
    return jnp.sum(partials)


def huber_loss(_input, _target, weight=None, delta=0.3):
    """Matches HuberLoss.forward from contour/modeling/losses.py."""
    if _input.shape != _target.shape:
        # PyTorch: _input.permute(0, 2, 3, 1).squeeze()  (NCHW -> NHWC -> squeeze)
        _input = jnp.squeeze(jnp.transpose(_input, (0, 2, 3, 1)))

    loss_shape = _input.shape
    n = math.prod(loss_shape) if loss_shape else 1
    delta = float(delta)

    if weight is None:
        total = _huber_sum_flat(_input, _target, None, delta)
    else:
        fused = False
        # Fused path: weight broadcast over dim 1 (PyTorch weight.unsqueeze(1)),
        # spatial size a multiple of 128 and >= one minimal tile of rows.
        if len(loss_shape) >= 3 and tuple(weight.shape) == loss_shape[:1] + loss_shape[2:]:
            B, C = int(loss_shape[0]), int(loss_shape[1])
            S = math.prod(loss_shape[2:])
            if S % LANES == 0:
                SR = S // LANES
                q = _sublane_quantum(_input.dtype, _target.dtype, weight.dtype)
                if SR >= q:
                    total = _huber_sum_fused(_input, _target, weight, delta, B, C, SR)
                    fused = True
        if not fused:
            # Fallback: materialize the broadcast weight (still big-block kernel).
            w_full = jnp.broadcast_to(jnp.expand_dims(weight, 1), loss_shape)
            total = _huber_sum_flat(_input, _target, w_full, delta)

    return (total / n).astype(jnp.float32)


def _huber_loss_ref(_input, _target, weight=None, delta=0.3):
    if _input.shape != _target.shape:
        _input = jnp.squeeze(jnp.transpose(_input, (0, 2, 3, 1)))
    x = _input.astype(jnp.float32)
    t = _target.astype(jnp.float32)
    abs_diff = jnp.abs(x - t)
    loss = jnp.where(abs_diff < delta, 0.5 * abs_diff ** 2,
                     delta * abs_diff - 0.5 * delta ** 2)
    if weight is not None:
        loss = loss * jnp.expand_dims(weight.astype(jnp.float32), 1)
    return jnp.mean(loss)


if __name__ == "__main__":
    key = jax.random.PRNGKey(0)
    k1, k2, k3, k4, k5, k6 = jax.random.split(key, 6)

    # 1) unweighted, matching shapes (2-input flat kernel)
    B, C, H, W = 2, 4, 16, 16
    x = jax.random.normal(k1, (B, C, H, W), jnp.float32)
    tgt = jax.random.normal(k2, (B, C, H, W), jnp.float32)
    out = jax.block_until_ready(huber_loss(x, tgt, delta=0.3))
    ref = _huber_loss_ref(x, tgt, delta=0.3)
    assert jnp.allclose(out, ref, rtol=1e-5, atol=1e-6), (out, ref)

    # 2) weighted, spatial too small for the fused path (3-input flat kernel)
    wgt = jax.random.uniform(k3, (B, H, W), jnp.float32)
    out_w = jax.block_until_ready(huber_loss(x, tgt, weight=wgt, delta=0.3))
    ref_w = _huber_loss_ref(x, tgt, weight=wgt, delta=0.3)
    assert jnp.allclose(out_w, ref_w, rtol=1e-5, atol=1e-6), (out_w, ref_w)

    # 3) weighted, spatial = 32*64 -> fused weight kernel (no broadcast copy)
    H2, W2 = 32, 64
    x2 = jax.random.normal(k4, (B, C, H2, W2), jnp.float32)
    t2 = jax.random.normal(k5, (B, C, H2, W2), jnp.float32)
    w2 = jax.random.uniform(k6, (B, H2, W2), jnp.float32)
    out_f = jax.block_until_ready(huber_loss(x2, t2, weight=w2, delta=0.3))
    ref_f = _huber_loss_ref(x2, t2, weight=w2, delta=0.3)
    assert jnp.allclose(out_f, ref_f, rtol=1e-5, atol=1e-6), (out_f, ref_f)

    # 4) shape-mismatch branch (NCHW -> NHWC -> squeeze), C == 1
    xm = jax.random.normal(k1, (B, 1, H, W), jnp.float32)
    tgt_m = jax.random.normal(k2, (B, H, W), jnp.float32)
    out_m = jax.block_until_ready(huber_loss(xm, tgt_m, delta=0.3))
    ref_m = _huber_loss_ref(xm, tgt_m, delta=0.3)
    assert jnp.allclose(out_m, ref_m, rtol=1e-5, atol=1e-6), (out_m, ref_m)

    print("KERNEL_OK")
</pallas_src>

<mosaic_0001>
module attributes {stable_mosaic.version = 11 : i64} {
  func.func @_huber_flat_kernel(%arg0: i32, %arg1: memref<16x128xf32, #tpu.memory_space<vmem>>, %arg2: memref<16x128xf32, #tpu.memory_space<vmem>>, %arg3: memref<1x8x128xf32, #tpu.memory_space<vmem>>) attributes {dimension_semantics = [#tpu.dimension_semantics<parallel>], iteration_bounds = array<i64: 1>, scalar_prefetch = 0 : i64, scratch_operands = 0 : i64, tpu.core_type = #tpu.core_type<tc>, window_params = [{transform_indices = @transform_0, window_bounds = array<i64: 16, 128>}, {transform_indices = @transform_1, window_bounds = array<i64: 16, 128>}, {transform_indices = @transform_2, window_bounds = array<i64: 1, 8, 128>}]} {
    %c0 = arith.constant 0 : index
    %c0_0 = arith.constant 0 : index
    %0 = vector.load %arg1[%c0, %c0_0] : memref<16x128xf32, #tpu.memory_space<vmem>>, vector<16x128xf32>
    %c0_1 = arith.constant 0 : index
    %c0_2 = arith.constant 0 : index
    %1 = vector.load %arg2[%c0_1, %c0_2] : memref<16x128xf32, #tpu.memory_space<vmem>>, vector<16x128xf32>
    %2 = arith.subf %0, %1 : vector<16x128xf32>
    %3 = math.absf %2 : vector<16x128xf32>
    %cst = arith.constant 3.000000e-01 : f32
    %4 = vector.broadcast %cst : f32 to vector<16x128xf32>
    %5 = arith.cmpf olt, %3, %4 : vector<16x128xf32>
    %cst_3 = arith.constant 5.000000e-01 : f32
    %6 = vector.broadcast %cst_3 : f32 to vector<16x128xf32>
    %7 = arith.mulf %6, %3 : vector<16x128xf32>
    %8 = arith.mulf %7, %3 : vector<16x128xf32>
    %cst_4 = arith.constant 3.000000e-01 : f32
    %9 = vector.broadcast %cst_4 : f32 to vector<16x128xf32>
    %10 = arith.mulf %9, %3 : vector<16x128xf32>
    %cst_5 = arith.constant 4.500000e-02 : f32
    %11 = vector.broadcast %cst_5 : f32 to vector<16x128xf32>
    %12 = arith.subf %10, %11 : vector<16x128xf32>
    %13 = arith.select %5, %8, %12 : vector<16x128xi1>, vector<16x128xf32>
    %14 = vector.shape_cast %13 : vector<16x128xf32> to vector<2x8x128xf32>
    %cst_6 = arith.constant dense<0.000000e+00> : vector<8x128xf32>
    %15 = vector.multi_reduction <add>, %14, %cst_6 [0] : vector<2x8x128xf32> to vector<8x128xf32>
    %c0_7 = arith.constant 0 : index
    %c0_8 = arith.constant 0 : index
    %c0_9 = arith.constant 0 : index
    %16 = vector.load %arg3[%c0_7, %c0_8, %c0_9] : memref<1x8x128xf32, #tpu.memory_space<vmem>>, vector<1x8x128xf32>
    %17 = vector.shape_cast %16 : vector<1x8x128xf32> to vector<8x128xf32>
    %18 = vector.shape_cast %15 : vector<8x128xf32> to vector<1x8x128xf32>
    tpu.vector_store %arg3[%c0_7, %c0_8, %c0_9], %18 {strides = array<i32>} : memref<1x8x128xf32, #tpu.memory_space<vmem>>, vector<1x8x128xf32>,
    return
  }
  func.func @transform_0(%arg0: i32) -> (i32, i32) {
    %c0_i32 = arith.constant 0 : i32
    %c0_i32_0 = arith.constant 0 : i32
    return %arg0, %c0_i32 : i32, i32
  }
  func.func @transform_1(%arg0: i32) -> (i32, i32) {
    %c0_i32 = arith.constant 0 : i32
    %c0_i32_0 = arith.constant 0 : i32
    return %arg0, %c0_i32 : i32, i32
  }
  func.func @transform_2(%arg0: i32) -> (i32, i32, i32) {
    %c0_i32 = arith.constant 0 : i32
    %c0_i32_0 = arith.constant 0 : i32
    %c0_i32_1 = arith.constant 0 : i32
    return %arg0, %c0_i32, %c0_i32_0 : i32, i32, i32
  }
}

</mosaic_0001>

<llo_original>
// kernel: tpu_custom_call.1
$region0: #{tpu_custom_call.1}
  #allocation0 [shape = 'u32[]', space=smem, size = 0x4, offset = 0x4, fixed_abs, tag = 'smem constant byte address 0x4 - core index']
  #allocation1 [shape = 'u32[72,128]{1,0:T(1,128)}', space=vmem, size = 0x9000, scoped, tag = 'internal scratch']
  %s0 = inlined_call_operand.hbm [shape: f32[16,128], index: 0, kind: input, shape index: {}]
  %s1 = inlined_call_operand.hbm [shape: f32[16,128], index: 1, kind: input, shape index: {}]
  %s2 = inlined_call_operand.hbm [shape: f32[1,8,128], index: 2, kind: output, shape index: {}]
  %s3 = sld [smem:[#allocation0]]
  $region26: #{tpu_custom_call.1} parent=0
    _
  %s5 = ssub.s32 1, %s3
  %s6 = scalar_select 0, %s5, %s3
  $region1: #{tpu_custom_call.1} parent=0
    #allocation2 [shape = 'u8[8192]{0}', space=vmem, size = 0x2000, scoped, tag = 'input window, operand 0, single buffered']
    #allocation3 [shape = 's32[1]{0}', space=sflag, size = 0x4, scoped, tag = 'scoped memory for tpu_custom_call.1']
    #allocation4 [shape = 's32[1]{0}', space=sflag, size = 0x4, scoped, tag = 'scoped memory for tpu_custom_call.1']
    #allocation5 [shape = 'u8[8192]{0}', space=vmem, size = 0x2000, scoped, tag = 'input window, operand 1, single buffered']
    #allocation6 [shape = 's32[1]{0}', space=sflag, size = 0x4, scoped, tag = 'scoped memory for tpu_custom_call.1']
    #allocation7 [shape = 'u8[4096]{0}', space=vmem, size = 0x1000, scoped, tag = 'output window, operand 0, single buffered']
    %7 = vsyncpa [#allocation3], 0
    %8 = vsyncpa [#allocation6], 0
    %9 = vsyncpa [#allocation4], 0
    // Predicated region
    $region2: #{tpu_custom_call.1} parent=1 // pred_check
      _
    $region3: #{tpu_custom_call.1} parent=1 // pred_check_branch
      %11 = sbr.rel (0) target = $region5
    $region4: #{tpu_custom_call.1} parent=1 // pred_region
      %13 = vsyncadd [#allocation3], 0
      %s14 = sshll.u32 %s0, 4
      %s15 = int_to_ptr.hbm [resolvable:$true] %s14
      %s16 = sshll.u32 [#allocation2], 4
      %s17 = int_to_ptr.vmem [resolvable:$true] %s16
      %22 = dma.hbm_to_vmem [thread:$0]  %s15, 256, %s17, [#allocation3], 128, 128, 8
    $region5: #{tpu_custom_call.1} parent=1 // pred_fallthru
      _
    // Predicated region
    $region6: #{tpu_custom_call.1} parent=1 // pred_check
      _
    $region7: #{tpu_custom_call.1} parent=1 // pred_check_branch
      %24 = sbr.rel (0) target = $region9
    $region8: #{tpu_custom_call.1} parent=1 // pred_region
      %26 = vsyncadd [#allocation6], 0
      %s27 = sshll.u32 %s1, 4
      %s28 = int_to_ptr.hbm [resolvable:$true] %s27
      %s29 = sshll.u32 [#allocation5], 4
      %s30 = int_to_ptr.vmem [resolvable:$true] %s29
      %35 = dma.hbm_to_vmem [thread:$0]  %s28, 256, %s30, [#allocation6], 128, 128, 8
    $region9: #{tpu_custom_call.1} parent=1 // pred_fallthru
      _
    // Predicated region
    $region10: #{tpu_custom_call.1} parent=1 // pred_check
      _
    $region11: #{tpu_custom_call.1} parent=1 // pred_check_branch
      %37 = sbr.rel (0) target = $region13
    $region12: #{tpu_custom_call.1} parent=1 // pred_region
      %39 = dma.done [#allocation3], 256
    $region13: #{tpu_custom_call.1} parent=1 // pred_fallthru
      _
    // Predicated region
    $region14: #{tpu_custom_call.1} parent=1 // pred_check
      _
    $region15: #{tpu_custom_call.1} parent=1 // pred_check_branch
      %41 = sbr.rel (0) target = $region17
    $region16: #{tpu_custom_call.1} parent=1 // pred_region
      %43 = dma.done [#allocation6], 256
    $region17: #{tpu_custom_call.1} parent=1 // pred_fallthru
      _
    %v44 = vld [vmem:[#allocation2] sm:$0xff]
    %v45 = vld [vmem:[#allocation2 + $0x8] sm:$0xff]
    %v46 = vld [vmem:[#allocation5] sm:$0xff]
    %v47 = vld [vmem:[#allocation5 + $0x8] sm:$0xff]
    %v48 = vsub.f32 %v44, %v46
    %v49 = vsub.f32 %v45, %v47
    %v50 = vand.u32 2147483647, %v48
    %v51 = vand.u32 2147483647, %v49
    %vm52 = vcmp.lt.f32.partialorder %v50, 0.3
    %vm53 = vcmp.lt.f32.partialorder %v51, 0.3
    %v54 = vmul.f32 %v50, 0.5
    %v55 = vmul.f32 %v51, 0.5
    %v56 = vmul.f32 %v54, %v50
    %v57 = vmul.f32 %v55, %v51
    %v58 = vmul.f32 %v50, 0.3
    %v59 = vmul.f32 %v51, 0.3
    %v60 = vsub.f32 %v58, 0.045
    %v61 = vsub.f32 %v59, 0.045
    %v62 = vsel %vm52, %v56, %v60
    %v63 = vsel %vm53, %v57, %v61
    %v64 = vadd.f32 %v62, %v63
    %65 = vst [vmem:[#allocation7] sm:$0xff] %v64
    // Predicated region
    $region18: #{tpu_custom_call.1} parent=1 // pred_check
      _
    $region19: #{tpu_custom_call.1} parent=1 // pred_check_branch
      %67 = sbr.rel (0) target = $region21
    $region20: #{tpu_custom_call.1} parent=1 // pred_region
      %69 = vsyncadd [#allocation4], 0
      %s71 = sshll.u32 [#allocation7], 4
      %s72 = int_to_ptr.vmem [resolvable:$true] %s71
      %s73 = sshll.u32 %s2, 4
      %s74 = int_to_ptr.hbm [resolvable:$true] %s73
      %76 = dma.vmem_to_hbm [thread:$0]  %s72, 128, %s74, [#allocation4]
    $region21: #{tpu_custom_call.1} parent=1 // pred_fallthru
      _
    // Predicated region
    $region22: #{tpu_custom_call.1} parent=1 // pred_check
      _
    $region23: #{tpu_custom_call.1} parent=1 // pred_check_branch
      %78 = sbr.rel (0) target = $region25
    $region24: #{tpu_custom_call.1} parent=1 // pred_region
      %80 = dma.done [#allocation4], 128
    $region25: #{tpu_custom_call.1} parent=1 // pred_fallthru
      _
    %81 = vsyncpa [#allocation3], 1
    %82 = vsyncpa [#allocation6], 1
    %83 = vsyncpa [#allocation4], 1

</llo_original>
